<compile_context>
chip_gen: v7x
topology: tpu7x:2x2x1
jax: 0.10.0
libtpu: 0.0.40
codegen_flags: <defaults>
</compile_context>

<pallas_src>
import jax
import jax.numpy as jnp
from jax.experimental import pallas as pl
from jax.experimental.pallas import tpu as pltpu


def _reward_criterion_kernel(inp_ref, seq_ref, rew_ref, msk_ref, num_ref):
    """One grid step: (b, t_tile, v_tile).

    inp_ref: (1, tT, tV) float   -- current vocab tile of the log-probs
    seq_ref: (1, tT, 1)  int32   -- token ids for this T tile (V-invariant)
    rew_ref: (1, tT, 1)  float32 -- rewards for this T tile (V-invariant)
    msk_ref: (1, tT, 1)  float32 -- shifted mask for this T tile (V-invariant)
    num_ref: (1, 1, 8, 128) f32  -- per-(b, t_tile) partial numerator
                                    (resident & accumulated across the V axis)
    """
    v_idx = pl.program_id(2)
    t_v = inp_ref.shape[2]

    @pl.when(v_idx == 0)
    def _():
        num_ref[...] = jnp.zeros_like(num_ref)

    inp = inp_ref[...]                         # (1, tT, tV)
    seq = seq_ref[...]                         # (1, tT, 1)
    rew = rew_ref[...]                         # (1, tT, 1)
    msk = msk_ref[...]                         # (1, tT, 1)

    # Global vocab index of each lane in this tile.
    vocab = jax.lax.broadcasted_iota(jnp.int32, inp.shape, 2) + v_idx * t_v

    # gathered[b,t] contribution from this vocab tile (0 if the token id is
    # not inside this tile); force float32 accumulation.
    gathered = jnp.sum(
        jnp.where(vocab == seq, inp, 0).astype(jnp.float32),
        axis=-1, keepdims=True)                # (1, tT, 1)

    partial = jnp.sum(-gathered * rew * msk)   # scalar f32
    num_ref[...] += partial                    # broadcast into lane-padded block


def _pick_tile(dim, unit, cap):
    """Largest multiple of `unit` that divides `dim` and is <= cap, else `dim`."""
    best = None
    t = unit
    while t <= min(dim, cap):
        if dim % t == 0:
            best = t
        t += unit
    return best if best is not None else dim


def reward_criterion(inp, seq, reward):
    """inp: (B, T, V) float, seq: (B, T) int, reward: (B, T) float -> scalar f32."""
    B, T, V = inp.shape
    seq = seq.astype(jnp.int32)
    reward = reward.astype(jnp.float32)

    # Shifted mask: [1, (seq[:, :-1] > 0)].  Computed here (tiny (B,T) op) so
    # that T-tiling inside the kernel stays correct across tile boundaries.
    prev_tok = (seq > 0).astype(jnp.float32)
    mask = jnp.concatenate(
        [jnp.ones((B, 1), jnp.float32), prev_tok[:, :-1]], axis=1)

    # Tile sizes: sublane-aligned T tile, lane-aligned V tile, ~<=2 MiB per
    # f32 input block (comfortable for double-buffering on v5e/v6e/v7x).
    tT = _pick_tile(T, 8, 256)
    tV = _pick_tile(V, 128, 2048)
    nT = T // tT
    nV = V // tV

    # Small per-(b,t) operands carried as (B, T, 1) so their blocks satisfy
    # the (8, 128) layout rules and stay V-invariant.
    seq3 = seq[:, :, None]
    rew3 = reward[:, :, None]
    msk3 = mask[:, :, None]

    partials = pl.pallas_call(
        _reward_criterion_kernel,
        out_shape=jax.ShapeDtypeStruct((B, nT, 8, 128), jnp.float32),
        grid_spec=pltpu.PrefetchScalarGridSpec(
            num_scalar_prefetch=0,
            grid=(B, nT, nV),
            in_specs=[
                pl.BlockSpec((1, tT, tV), lambda b, t, v: (b, t, v)),
                pl.BlockSpec((1, tT, 1), lambda b, t, v: (b, t, 0)),
                pl.BlockSpec((1, tT, 1), lambda b, t, v: (b, t, 0)),
                pl.BlockSpec((1, tT, 1), lambda b, t, v: (b, t, 0)),
            ],
            out_specs=pl.BlockSpec((1, 1, 8, 128), lambda b, t, v: (b, t, 0, 0)),
        ),
        compiler_params=pltpu.CompilerParams(
            dimension_semantics=("parallel", "parallel", "arbitrary"),
            vmem_limit_bytes=32 * 1024 * 1024,
        ),
    )(inp, seq3, rew3, msk3)

    num = jnp.sum(partials[:, :, 0, 0])
    den = jnp.sum(mask)
    return num / den


def _reference(inp, seq, reward):
    # Pure-JAX reference mirroring the PyTorch forward.
    gathered = jnp.take_along_axis(inp, seq[:, :, None], axis=2)[:, :, 0]
    m = (seq > 0).astype(jnp.float32)
    mask = jnp.concatenate(
        [jnp.ones((seq.shape[0], 1), jnp.float32), m[:, :-1]], axis=1)
    return jnp.sum(-gathered * reward * mask) / jnp.sum(mask)


if __name__ == "__main__":
    key = jax.random.PRNGKey(0)
    B, T, V = 2, 8, 32
    k1, k2, k3 = jax.random.split(key, 3)

    # log-prob-like inputs
    logits = jax.random.normal(k1, (B, T, V), dtype=jnp.float32)
    inp = jax.nn.log_softmax(logits, axis=-1)
    # token ids, with some zeros (padding) to exercise the mask
    seq = jax.random.randint(k2, (B, T), 0, V, dtype=jnp.int32)
    seq = seq.at[:, -2:].set(0)
    reward = jax.random.normal(k3, (B, T), dtype=jnp.float32)

    out = reward_criterion(inp, seq, reward)
    jax.block_until_ready(out)

    ref = _reference(inp, seq, reward)
    assert jnp.allclose(out, ref, atol=1e-5, rtol=1e-5), (out, ref)
    print("KERNEL_OK")
</pallas_src>

<mosaic_0001>
module attributes {stable_mosaic.version = 11 : i64} {
  func.func @_reward_criterion_kernel(%arg0: i32, %arg1: i32, %arg2: i32, %arg3: memref<1x8x32xf32, #tpu.memory_space<vmem>>, %arg4: memref<1x8x1xi32, #tpu.memory_space<vmem>>, %arg5: memref<1x8x1xf32, #tpu.memory_space<vmem>>, %arg6: memref<1x8x1xf32, #tpu.memory_space<vmem>>, %arg7: memref<1x1x8x128xf32, #tpu.memory_space<vmem>>) attributes {dimension_semantics = [#tpu.dimension_semantics<parallel>, #tpu.dimension_semantics<parallel>, #tpu.dimension_semantics<arbitrary>], iteration_bounds = array<i64: 2, 1, 1>, scalar_prefetch = 0 : i64, scratch_operands = 0 : i64, tpu.core_type = #tpu.core_type<tc>, window_params = [{transform_indices = @transform_0, window_bounds = array<i64: 1, 8, 32>}, {transform_indices = @transform_1, window_bounds = array<i64: 1, 8, 1>}, {transform_indices = @transform_2, window_bounds = array<i64: 1, 8, 1>}, {transform_indices = @transform_3, window_bounds = array<i64: 1, 8, 1>}, {transform_indices = @transform_4, window_bounds = array<i64: 1, 1, 8, 128>}]} {
    %c0_i32 = arith.constant 0 : i32
    %0 = arith.cmpi eq, %arg2, %c0_i32 : i32
    %1 = arith.extui %0 : i1 to i32
    %c0_i32_0 = arith.constant 0 : i32
    %2 = arith.cmpi ne, %1, %c0_i32_0 : i32
    scf.if %2 {
      %cst_23 = arith.constant 0.000000e+00 : f32
      %30 = vector.broadcast %cst_23 : f32 to vector<1x1x8x128xf32>
      %c0_24 = arith.constant 0 : index
      %c0_25 = arith.constant 0 : index
      %c0_26 = arith.constant 0 : index
      %c0_27 = arith.constant 0 : index
      %31 = vector.load %arg7[%c0_24, %c0_25, %c0_26, %c0_27] : memref<1x1x8x128xf32, #tpu.memory_space<vmem>>, vector<1x1x8x128xf32>
      tpu.vector_store %arg7[%c0_24, %c0_25, %c0_26, %c0_27], %30 {strides = array<i32>} : memref<1x1x8x128xf32, #tpu.memory_space<vmem>>, vector<1x1x8x128xf32>,
    } else {
    }
    %c0 = arith.constant 0 : index
    %c0_1 = arith.constant 0 : index
    %c0_2 = arith.constant 0 : index
    %3 = vector.load %arg3[%c0, %c0_1, %c0_2] : memref<1x8x32xf32, #tpu.memory_space<vmem>>, vector<1x8x32xf32>
    %c0_3 = arith.constant 0 : index
    %c0_4 = arith.constant 0 : index
    %c0_5 = arith.constant 0 : index
    %4 = vector.load %arg4[%c0_3, %c0_4, %c0_5] : memref<1x8x1xi32, #tpu.memory_space<vmem>>, vector<1x8x1xi32>
    %c0_6 = arith.constant 0 : index
    %c0_7 = arith.constant 0 : index
    %c0_8 = arith.constant 0 : index
    %5 = vector.load %arg5[%c0_6, %c0_7, %c0_8] : memref<1x8x1xf32, #tpu.memory_space<vmem>>, vector<1x8x1xf32>
    %c0_9 = arith.constant 0 : index
    %c0_10 = arith.constant 0 : index
    %c0_11 = arith.constant 0 : index
    %6 = vector.load %arg6[%c0_9, %c0_10, %c0_11] : memref<1x8x1xf32, #tpu.memory_space<vmem>>, vector<1x8x1xf32>
    %7 = tpu.iota {dimensions = array<i32: 2>} : vector<1x8x32xi32>
    %c32_i32 = arith.constant 32 : i32
    %8 = arith.muli %arg2, %c32_i32 : i32
    %9 = vector.broadcast %8 : i32 to vector<1x8x32xi32>
    %10 = arith.addi %7, %9 : vector<1x8x32xi32>
    %11 = vector.broadcast %4 : vector<1x8x1xi32> to vector<1x8x32xi32>
    %12 = arith.cmpi eq, %10, %11 : vector<1x8x32xi32>
    %c0_i32_12 = arith.constant 0 : i32
    %13 = arith.sitofp %c0_i32_12 : i32 to f32
    %14 = vector.broadcast %13 : f32 to vector<1x8x32xf32>
    %15 = arith.select %12, %3, %14 : vector<1x8x32xi1>, vector<1x8x32xf32>
    %cst = arith.constant dense<0.000000e+00> : vector<1x8xf32>
    %16 = vector.multi_reduction <add>, %15, %cst [2] : vector<1x8x32xf32> to vector<1x8xf32>
    %17 = vector.shape_cast %16 : vector<1x8xf32> to vector<1x8x1xf32>
    %cst_13 = arith.constant 0.000000e+00 : f32
    %18 = vector.broadcast %cst_13 : f32 to vector<1x8x1xf32>
    %19 = arith.subf %18, %17 : vector<1x8x1xf32>
    %20 = arith.mulf %19, %5 : vector<1x8x1xf32>
    %21 = arith.mulf %20, %6 : vector<1x8x1xf32>
    %22 = vector.shape_cast %21 : vector<1x8x1xf32> to vector<1x1x8x1xf32>
    %cst_14 = arith.constant dense<0.000000e+00> : vector<1xf32>
    %23 = vector.multi_reduction <add>, %22, %cst_14 [1, 2, 3] : vector<1x1x8x1xf32> to vector<1xf32>
    %24 = vector.shape_cast %23 : vector<1xf32> to vector<1x1x1x1xf32>
    %25 = vector.extract %24[0, 0, 0, 0] : f32 from vector<1x1x1x1xf32>
    %c0_15 = arith.constant 0 : index
    %c0_16 = arith.constant 0 : index
    %c0_17 = arith.constant 0 : index
    %c0_18 = arith.constant 0 : index
    %26 = vector.load %arg7[%c0_15, %c0_16, %c0_17, %c0_18] : memref<1x1x8x128xf32, #tpu.memory_space<vmem>>, vector<1x1x8x128xf32>
    %27 = vector.broadcast %25 : f32 to vector<1x1x8x128xf32>
    %28 = arith.addf %26, %27 : vector<1x1x8x128xf32>
    %c0_19 = arith.constant 0 : index
    %c0_20 = arith.constant 0 : index
    %c0_21 = arith.constant 0 : index
    %c0_22 = arith.constant 0 : index
    %29 = vector.load %arg7[%c0_19, %c0_20, %c0_21, %c0_22] : memref<1x1x8x128xf32, #tpu.memory_space<vmem>>, vector<1x1x8x128xf32>
    tpu.vector_store %arg7[%c0_19, %c0_20, %c0_21, %c0_22], %28 {strides = array<i32>} : memref<1x1x8x128xf32, #tpu.memory_space<vmem>>, vector<1x1x8x128xf32>,
    return
  }
  func.func @transform_0(%arg0: i32, %arg1: i32, %arg2: i32) -> (i32, i32, i32) {
    %c0_i32 = arith.constant 0 : i32
    return %arg0, %arg1, %arg2 : i32, i32, i32
  }
  func.func @transform_1(%arg0: i32, %arg1: i32, %arg2: i32) -> (i32, i32, i32) {
    %c0_i32 = arith.constant 0 : i32
    %c0_i32_0 = arith.constant 0 : i32
    return %arg0, %arg1, %c0_i32 : i32, i32, i32
  }
  func.func @transform_2(%arg0: i32, %arg1: i32, %arg2: i32) -> (i32, i32, i32) {
    %c0_i32 = arith.constant 0 : i32
    %c0_i32_0 = arith.constant 0 : i32
    return %arg0, %arg1, %c0_i32 : i32, i32, i32
  }
  func.func @transform_3(%arg0: i32, %arg1: i32, %arg2: i32) -> (i32, i32, i32) {
    %c0_i32 = arith.constant 0 : i32
    %c0_i32_0 = arith.constant 0 : i32
    return %arg0, %arg1, %c0_i32 : i32, i32, i32
  }
  func.func @transform_4(%arg0: i32, %arg1: i32, %arg2: i32) -> (i32, i32, i32, i32) {
    %c0_i32 = arith.constant 0 : i32
    %c0_i32_0 = arith.constant 0 : i32
    %c0_i32_1 = arith.constant 0 : i32
    return %arg0, %arg1, %c0_i32, %c0_i32_0 : i32, i32, i32, i32
  }
}

</mosaic_0001>

<llo_original>
// kernel: tpu_custom_call.1
$region0: #{tpu_custom_call.1}
  #allocation0 [shape = 'u32[]', space=smem, size = 0x4, offset = 0x4, fixed_abs, tag = 'smem constant byte address 0x4 - core index']
  #allocation1 [shape = 'u32[144,128]{1,0:T(1,128)}', space=vmem, size = 0x12000, scoped, tag = 'internal scratch']
  %s0 = inlined_call_operand.vmem [shape: f32[2,8,32], index: 0, kind: input, shape index: {}]
  %s1 = inlined_call_operand.vmem [shape: s32[2,8,1], index: 1, kind: input, shape index: {}]
  %s2 = inlined_call_operand.vmem [shape: f32[2,8,1], index: 2, kind: input, shape index: {}]
  %s3 = inlined_call_operand.vmem [shape: f32[2,8,1], index: 3, kind: input, shape index: {}]
  %s4 = inlined_call_operand.hbm [shape: f32[2,1,8,128], index: 4, kind: output, shape index: {}]
  %s5 = sld [smem:[#allocation0]]
  $region53: #{tpu_custom_call.1} parent=0
    _
  %s7 = ssub.s32 1, %s5
  %s8 = scalar_select 0, %s7, %s5
  $region1: #{tpu_custom_call.1} parent=0
    #allocation2 [shape = 'u8[8192]{0}', space=vmem, size = 0x2000, scoped, tag = 'output window, operand 0']
    #allocation3 [shape = 's32[2]{0}', space=sflag, size = 0x8, scoped, tag = 'scoped memory for tpu_custom_call.1']
    %9 = vsyncpa [#allocation3], 0
    %s10 = scalar_lea.sflag [#allocation3], 1
    %11 = vsyncpa %s10, 0
    loop: start=0, step=1, limit=4
    $region2: #{tpu_custom_call.1} parent=1 // loop_pre_header
      _
    $region3: #{tpu_custom_call.1} parent=1 // loop_header
      %s13 = sphi 0, %s17
      %p14 = scmp.ge.s32.totalorder %s13, 4
      %s20 = sphi 0, %s39
      %s21 = sphi 0, %s35
      %s22 = sphi 0, %s31
      %s23 = sphi 0, %s20
      %s24 = sphi 0, %s21
      %s25 = sphi 0, %s22
      %s26 = sphi 0, %s23
      %s27 = sphi 0, %s24
      %s28 = sphi 0, %s25
      %s46 = sphi 0, %s48
      %s49 = sphi 0, %s46
      %s50 = sphi 0, %s49
      %s66 = sphi 0, %s50
      %s74 = sphi 0, %s76
      %s77 = sphi 0, %s74
      %s78 = sphi 0, %s77
      %s94 = sphi 0, %s78
      %s102 = sphi 0, %s104
      %s105 = sphi 0, %s102
      %s106 = sphi 0, %s105
      %s122 = sphi 0, %s106
      %s130 = sphi 0, %s132
      %s133 = sphi 0, %s130
      %s134 = sphi 0, %s133
      %s150 = sphi 0, %s134
      %s158 = sphi 0, %s160
      %s161 = sphi 0, %s158
      %s162 = sphi 0, %s161
      %s178 = sphi 0, %s162
    $region4: #{tpu_custom_call.1} parent=1 // loop_header_branch
      %16 = sbr.rel (%p14) target = $region8
    $region5: #{tpu_custom_call.1} parent=1 // loop_body
      %s18 = ssub.s32 %s13, 1
      %s19 = ssub.s32 %s13, 2
      %s29 = sadd.s32 1, %s22
      %p30 = scmp.ge.s32.totalorder %s29, 1
      %s31 = scalar_select %p30, 0, %s29
      %s32 = sadd.s32 1, %s21
      %s33 = scalar_select %p30, %s32, %s21
      %p34 = scmp.ge.s32.totalorder %s33, 1
      %s35 = scalar_select %p34, 0, %s33
      %s36 = sadd.s32 1, %s20
      %s37 = scalar_select %p34, %s36, %s20
      %p38 = scmp.ge.s32.totalorder %s37, 2
      %s39 = scalar_select %p38, 0, %s37
      %s40 = ssub.s32 %s20, %s39
      %s41 = ssub.s32 %s21, %s35
      %s42 = sor.u32 %s40, %s41
      %s43 = ssub.s32 %s22, %s31
      %s44 = sor.u32 %s42, %s43
      %p45 = scmp.eq.s32.totalorder %s44, 0
      %s47 = sadd.s32 %s46, 1
      %s48 = scalar_select %p45, %s46, %s47
      %p51 = pneg %p45
      %p52 = scmp.eq.s32.totalorder %s13, 1
      %p53 = por %p51, %p52
      %p54 = scmp.ne.s32.totalorder %s46, %s49
      %p55 = scmp.eq.s32.totalorder %s13, 0
      %p56 = por %p54, %p55
      %p57 = scmp.ne.s32.totalorder %s46, %s49
      %p58 = scmp.eq.s32.totalorder %s18, 1
      %p59 = por %p57, %p58
      %p60 = scmp.ne.s32.totalorder %s49, %s50
      %p61 = scmp.eq.s32.totalorder %s18, 0
      %p62 = por %p60, %p61
      %p63 = scmp.ne.s32.totalorder %s49, %s50
      %p64 = scmp.eq.s32.totalorder %s19, 1
      %p65 = por %p63, %p64
      %p67 = scmp.ne.s32.totalorder %s50, %s66
      %p68 = scmp.eq.s32.totalorder %s19, 0
      %p69 = por %p67, %p68
      %s70 = ssub.s32 %s20, %s39
      %s71 = ssub.s32 %s21, %s35
      %s72 = sor.u32 %s70, %s71
      %p73 = scmp.eq.s32.totalorder %s72, 0
      %s75 = sadd.s32 %s74, 1
      %s76 = scalar_select %p73, %s74, %s75
      %p79 = pneg %p73
      %p80 = scmp.eq.s32.totalorder %s13, 1
      %p81 = por %p79, %p80
      %p82 = scmp.ne.s32.totalorder %s74, %s77
      %p83 = scmp.eq.s32.totalorder %s13, 0
      %p84 = por %p82, %p83
      %p85 = scmp.ne.s32.totalorder %s74, %s77
      %p86 = scmp.eq.s32.totalorder %s18, 1
      %p87 = por %p85, %p86
      %p88 = scmp.ne.s32.totalorder %s77, %s78
      %p89 = scmp.eq.s32.totalorder %s18, 0
      %p90 = por %p88, %p89
      %p91 = scmp.ne.s32.totalorder %s77, %s78
      %p92 = scmp.eq.s32.totalorder %s19, 1
      %p93 = por %p91, %p92
      %p95 = scmp.ne.s32.totalorder %s78, %s94
      %p96 = scmp.eq.s32.totalorder %s19, 0
      %p97 = por %p95, %p96
      %s98 = ssub.s32 %s20, %s39
      %s99 = ssub.s32 %s21, %s35
      %s100 = sor.u32 %s98, %s99
      %p101 = scmp.eq.s32.totalorder %s100, 0
      %s103 = sadd.s32 %s102, 1
      %s104 = scalar_select %p101, %s102, %s103
      %p107 = pneg %p101
      %p108 = scmp.eq.s32.totalorder %s13, 1
      %p109 = por %p107, %p108
      %p110 = scmp.ne.s32.totalorder %s102, %s105
      %p111 = scmp.eq.s32.totalorder %s13, 0
      %p112 = por %p110, %p111
      %p113 = scmp.ne.s32.totalorder %s102, %s105
      %p114 = scmp.eq.s32.totalorder %s18, 1
      %p115 = por %p113, %p114
      %p116 = scmp.ne.s32.totalorder %s105, %s106
      %p117 = scmp.eq.s32.totalorder %s18, 0
      %p118 = por %p116, %p117
      %p119 = scmp.ne.s32.totalorder %s105, %s106
      %p120 = scmp.eq.s32.totalorder %s19, 1
      %p121 = por %p119, %p120
      %p123 = scmp.ne.s32.totalorder %s106, %s122
      %p124 = scmp.eq.s32.totalorder %s19, 0
      %p125 = por %p123, %p124
      %s126 = ssub.s32 %s20, %s39
      %s127 = ssub.s32 %s21, %s35
      %s128 = sor.u32 %s126, %s127
      %p129 = scmp.eq.s32.totalorder %s128, 0
      %s131 = sadd.s32 %s130, 1
      %s132 = scalar_select %p129, %s130, %s131
      %p135 = pneg %p129
      %p136 = scmp.eq.s32.totalorder %s13, 1
      %p137 = por %p135, %p136
      %p138 = scmp.ne.s32.totalorder %s130, %s133
      %p139 = scmp.eq.s32.totalorder %s13, 0
      %p140 = por %p138, %p139
      %p141 = scmp.ne.s32.totalorder %s130, %s133
      %p142 = scmp.eq.s32.totalorder %s18, 1
      %p143 = por %p141, %p142
      %p144 = scmp.ne.s32.totalorder %s133, %s134
      %p145 = scmp.eq.s32.totalorder %s18, 0
      %p146 = por %p144, %p145
      %p147 = scmp.ne.s32.totalorder %s133, %s134
      %p148 = scmp.eq.s32.totalorder %s19, 1
      %p149 = por %p147, %p148
      %p151 = scmp.ne.s32.totalorder %s134, %s150
      %p152 = scmp.eq.s32.totalorder %s19, 0
      %p153 = por %p151, %p152
      %s154 = ssub.s32 %s20, %s39
      %s155 = ssub.s32 %s21, %s35
      %s156 = sor.u32 %s154, %s155
      %p157 = scmp.eq.s32.totalorder %s156, 0
      %s159 = sadd.s32 %s158, 1
      %s160 = scalar_select %p157, %s158, %s159
      %p163 = pneg %p157
      %p164 = scmp.eq.s32.totalorder %s13, 1
      %p165 = por %p163, %p164
      %p166 = scmp.ne.s32.totalorder %s158, %s161
      %p167 = scmp.eq.s32.totalorder %s13, 0
      %p168 = por %p166, %p167
      %p169 = scmp.ne.s32.totalorder %s158, %s161
      %p170 = scmp.eq.s32.totalorder %s18, 1
      %p171 = por %p169, %p170
      %p172 = scmp.ne.s32.totalorder %s161, %s162
      %p173 = scmp.eq.s32.totalorder %s18, 0
      %p174 = por %p172, %p173
      %p175 = scmp.ne.s32.totalorder %s161, %s162
      %p176 = scmp.eq.s32.totalorder %s19, 1
      %p177 = por %p175, %p176
      %p179 = scmp.ne.s32.totalorder %s162, %s178
      %p180 = scmp.eq.s32.totalorder %s19, 0
      %p181 = por %p179, %p180
      %p182 = scmp.le.s32.totalorder 1, %s13
      %p183 = scmp.lt.s32.totalorder %s13, 3
      %p184 = pnand %p182, %p183
      %p185 = pneg %p184
      // Predicated region
      $region9: #{tpu_custom_call.1} parent=5 // pred_check
        _
      $region10: #{tpu_custom_call.1} parent=5 // pred_check_branch
        %187 = sbr.rel (%p184) target = $region12
      $region11: #{tpu_custom_call.1} parent=5 // pred_region
        %s188 = ssub.s32 %s13, 1
      $region12: #{tpu_custom_call.1} parent=5 // pred_fallthru
        _
      %p189 = scmp.lt.s32.totalorder %s13, 2
      // Predicated region
      $region13: #{tpu_custom_call.1} parent=5 // pred_check
        %p190 = pneg %p189
      $region14: #{tpu_custom_call.1} parent=5 // pred_check_branch
        %192 = sbr.rel (%p190) target = $region16
      $region15: #{tpu_custom_call.1} parent=5 // pred_region
        // Predicated region
        $region17: #{tpu_custom_call.1} parent=15 // pred_check
          %p193 = pneg %p56
        $region18: #{tpu_custom_call.1} parent=15 // pred_check_branch
          %195 = sbr.rel (%p193) target = $region20
        $region19: #{tpu_custom_call.1} parent=15 // pred_region
          %p196 = scmp.lt.s32.totalorder %s20, 1
          %s197 = scalar_select %p196, %s20, 1
          %p198 = scmp.lt.s32.totalorder %s21, 0
          %s199 = scalar_select %p198, %s21, 0
          %p200 = scmp.lt.s32.totalorder %s22, 0
          %s201 = scalar_select %p200, %s22, 0
          %s202 = sadd.s32 %s201, %s199
          %s203 = sadd.s32 %s202, %s197
          %s204 = smul.addr %s203, 8
          %s205 = scalar_lea.vmem %s0, %s204
        $region20: #{tpu_custom_call.1} parent=15 // pred_fallthru
          _
        // Predicated region
        $region21: #{tpu_custom_call.1} parent=15 // pred_check
          %p206 = pneg %p84
        $region22: #{tpu_custom_call.1} parent=15 // pred_check_branch
          %208 = sbr.rel (%p206) target = $region24
        $region23: #{tpu_custom_call.1} parent=15 // pred_region
          %p209 = scmp.lt.s32.totalorder %s20, 1
          %s210 = scalar_select %p209, %s20, 1
          %p211 = scmp.lt.s32.totalorder %s21, 0
          %s212 = scalar_select %p211, %s21, 0
          %s213 = sadd.s32 %s212, %s210
          %s214 = smul.addr %s213, 8
          %s215 = scalar_lea.vmem %s1, %s214
        $region24: #{tpu_custom_call.1} parent=15 // pred_fallthru
          _
        // Predicated region
        $region25: #{tpu_custom_call.1} parent=15 // pred_check
          %p216 = pneg %p112
        $region26: #{tpu_custom_call.1} parent=15 // pred_check_branch
          %218 = sbr.rel (%p216) target = $region28
        $region27: #{tpu_custom_call.1} parent=15 // pred_region
          %p219 = scmp.lt.s32.totalorder %s20, 1
          %s220 = scalar_select %p219, %s20, 1
          %p221 = scmp.lt.s32.totalorder %s21, 0
          %s222 = scalar_select %p221, %s21, 0
          %s223 = sadd.s32 %s222, %s220
          %s224 = smul.addr %s223, 8
          %s225 = scalar_lea.vmem %s2, %s224
        $region28: #{tpu_custom_call.1} parent=15 // pred_fallthru
          _
        // Predicated region
        $region29: #{tpu_custom_call.1} parent=15 // pred_check
          %p226 = pneg %p140
        $region30: #{tpu_custom_call.1} parent=15 // pred_check_branch
          %228 = sbr.rel (%p226) target = $region32
        $region31: #{tpu_custom_call.1} parent=15 // pred_region
          %p229 = scmp.lt.s32.totalorder %s20, 1
          %s230 = scalar_select %p229, %s20, 1
          %p231 = scmp.lt.s32.totalorder %s21, 0
          %s232 = scalar_select %p231, %s21, 0
          %s233 = sadd.s32 %s232, %s230
          %s234 = smul.addr %s233, 8
          %s235 = scalar_lea.vmem %s3, %s234
        $region32: #{tpu_custom_call.1} parent=15 // pred_fallthru
          _
      $region16: #{tpu_custom_call.1} parent=5 // pred_fallthru
        _
      %p236 = scmp.le.s32.totalorder 1, %s13
      %p237 = scmp.lt.s32.totalorder %s13, 3
      %p238 = pnand %p236, %p237
      %p239 = pneg %p238
      // Predicated region
      $region33: #{tpu_custom_call.1} parent=5 // pred_check
        _
      $region34: #{tpu_custom_call.1} parent=5 // pred_check_branch
        %241 = sbr.rel (%p238) target = $region36
      $region35: #{tpu_custom_call.1} parent=5 // pred_region
        %s242 = ssub.s32 %s13, 1
        %p243 = scmp.lt.s32.totalorder %s23, 1
        %s244 = scalar_select %p243, %s23, 1
        %p245 = scmp.lt.s32.totalorder %s24, 0
        %s246 = scalar_select %p245, %s24, 0
        %p247 = scmp.lt.s32.totalorder %s25, 0
        %s248 = scalar_select %p247, %s25, 0
        %s249 = sadd.s32 %s248, %s246
        %s250 = sadd.s32 %s249, %s244
        %s251 = smul.addr %s250, 8
        %s252 = scalar_lea.vmem %s0, %s251
        %p253 = pneg %p62
        %p254 = pneg %p59
        %p255 = scmp.lt.s32.totalorder %s23, 1
        %s256 = scalar_select %p255, %s23, 1
        %p257 = scmp.lt.s32.totalorder %s24, 0
        %s258 = scalar_select %p257, %s24, 0
        %s259 = sadd.s32 %s258, %s256
        %s260 = smul.addr %s259, 8
        %s261 = scalar_lea.vmem %s1, %s260
        %p262 = pneg %p90
        %p263 = pneg %p87
        %p264 = scmp.lt.s32.totalorder %s23, 1
        %s265 = scalar_select %p264, %s23, 1
        %p266 = scmp.lt.s32.totalorder %s24, 0
        %s267 = scalar_select %p266, %s24, 0
        %s268 = sadd.s32 %s267, %s265
        %s269 = smul.addr %s268, 8
        %s270 = scalar_lea.vmem %s2, %s269
        %p271 = pneg %p118
        %p272 = pneg %p115
        %p273 = scmp.lt.s32.totalorder %s23, 1
        %s274 = scalar_select %p273, %s23, 1
        %p275 = scmp.lt.s32.totalorder %s24, 0
        %s276 = scalar_select %p275, %s24, 0
        %s277 = sadd.s32 %s276, %s274
        %s278 = smul.addr %s277, 8
        %s279 = scalar_lea.vmem %s3, %s278
        %p280 = pneg %p146
        %p281 = pneg %p143
        %p282 = pneg %p174
        %p283 = pneg %p171
        %s284 = sand.u32 %s161, 1
        %s285 = scalar_lea.sflag [#allocation3], %s284
        %s286 = sand.u32 %s161, 1
        %s287 = smul.addr %s286, 8
        %s288 = scalar_lea.vmem [#allocation2], %s287
        %p289 = scmp.lt.s32.totalorder %s23, 1
        %s290 = scalar_select %p289, %s23, 1
        %p291 = scmp.lt.s32.totalorder %s24, 0
        %s292 = scalar_select %p291, %s24, 0
        %p293 = scmp.lt.s32.totalorder %s25, 0
        %s294 = scalar_select %p293, %s25, 0
        %s295 = sadd.s32 %s294, %s292
        %s296 = sadd.s32 %s295, %s290
        %s297 = smul.addr %s296, 8
        %s298 = scalar_lea.vmem %s0, %s297
        %p299 = scmp.lt.s32.totalorder %s23, 1
        %s300 = scalar_select %p299, %s23, 1
        %p301 = scmp.lt.s32.totalorder %s24, 0
        %s302 = scalar_select %p301, %s24, 0
        %s303 = sadd.s32 %s302, %s300
        %s304 = smul.addr %s303, 8
        %s305 = scalar_lea.vmem %s1, %s304
        %p306 = scmp.lt.s32.totalorder %s23, 1
        %s307 = scalar_select %p306, %s23, 1
        %p308 = scmp.lt.s32.totalorder %s24, 0
        %s309 = scalar_select %p308, %s24, 0
        %s310 = sadd.s32 %s309, %s307
        %s311 = smul.addr %s310, 8
        %s312 = scalar_lea.vmem %s2, %s311
        %p313 = scmp.lt.s32.totalorder %s23, 1
        %s314 = scalar_select %p313, %s23, 1
        %p315 = scmp.lt.s32.totalorder %s24, 0
        %s316 = scalar_select %p315, %s24, 0
        %s317 = sadd.s32 %s316, %s314
        %s318 = smul.addr %s317, 8
        %s319 = scalar_lea.vmem %s3, %s318
        %p320 = scmp.eq.s32.totalorder %s25, 0
        // Predicated region
        $region37: #{tpu_custom_call.1} parent=35 // pred_check
          %p321 = pneg %p320
        $region38: #{tpu_custom_call.1} parent=35 // pred_check_branch
          %323 = sbr.rel (%p321) target = $region40
        $region39: #{tpu_custom_call.1} parent=35 // pred_region
          %324 = vst [vmem:[%s288] sm:$0xff] 0.0
        $region40: #{tpu_custom_call.1} parent=35 // pred_fallthru
          _
        %v325 = vld [vmem:[%s298] sm:$0xff]
        %v326 = vld [vmem:[%s305] sm:$0xff]
        %v327 = vld [vmem:[%s312] sm:$0xff]
        %v328 = vld [vmem:[%s319] sm:$0xff]
        %v329 = vlaneseq
        %v330 = vand.u32 %v329, 127
        %s331 = smul.u32 %s25, 32
        %v332 = vstv %s331
        %v333 = vadd.s32 %v330, %v332
        %334 = vset.pattern.permute.xlu0 0
        %335 = vperm.xlu0 %334, %v326
        %v336 = vpop.permute.xlu0 %335
        %vm337 = vcmp.eq.s32.totalorder %v333, %v336
        %v338 = vsel %vm337, %v325, 0.0
        %vm339 = vcmask 261120
        %v340 = vsel %vm339, %v338, 0.0
        %341 = vadd.xlane.f32.xlu0 %v340
        %v342 = vpop.xlane.xlu0 %341
        %v343 = vsub.f32 0.0, %v342
        %v344 = vmul.f32 %v343, %v327
        %v345 = vmul.f32 %v344, %v328
        %vm346 = vcmask 7168
        %v347 = vsel %vm346, %v345, 0.0
        %348 = vadd.xlane.f32.xlu0 %v347
        %v349 = vpop.xlane.xlu0 %348
        %v350 = vrot.slane %v349, 4
        %v351 = vadd.f32 %v349, %v350
        %v352 = vrot.slane %v351, 2
        %v353 = vadd.f32 %v351, %v352
        %v354 = vrot.slane %v353, 1
        %v355 = vadd.f32 %v353, %v354
        %s356 = vtos %v355
        %v357 = vld [vmem:[%s288] sm:$0xff]
        %v358 = vstv %s356
        %v359 = vadd.f32 %v357, %v358
        %360 = vst [vmem:[%s288] sm:$0xff] %v359
        %s361 = sand.u32 %s161, 1
        %s362 = scalar_lea.sflag [#allocation3], %s361
        %s363 = sand.u32 %s161, 1
        %s364 = smul.addr %s363, 8
        %s365 = scalar_lea.vmem [#allocation2], %s364
        // Predicated region
        $region41: #{tpu_custom_call.1} parent=35 // pred_check
          %p366 = pneg %p171
        $region42: #{tpu_custom_call.1} parent=35 // pred_check_branch
          %368 = sbr.rel (%p366) target = $region44
        $region43: #{tpu_custom_call.1} parent=35 // pred_region
          %s370 = ssub.s32 128, 128
          %371 = vsyncadd %s362, %s370
          %s372 = sadd.s32 %s24, %s23
          %s373 = smul.addr %s372, 128
          %s374 = scalar_lea.hbm %s4, %s373
          %s376 = sshll.u32 %s365, 4
          %s377 = int_to_ptr.vmem [resolvable:$true] %s376
          %379 = dma.vmem_to_hbm [thread:$0]  %s377, 128, %s374, %s362
        $region44: #{tpu_custom_call.1} parent=35 // pred_fallthru
          _
      $region36: #{tpu_custom_call.1} parent=5 // pred_fallthru
        _
      %p380 = scmp.le.s32.totalorder 2, %s13
      // Predicated region
      $region45: #{tpu_custom_call.1} parent=5 // pred_check
        %p381 = pneg %p380
      $region46: #{tpu_custom_call.1} parent=5 // pred_check_branch
        %383 = sbr.rel (%p381) target = $region48
      $region47: #{tpu_custom_call.1} parent=5 // pred_region
        %s384 = ssub.s32 %s13, 2
        // Predicated region
        $region49: #{tpu_custom_call.1} parent=47 // pred_check
          %p385 = pneg %p177
        $region50: #{tpu_custom_call.1} parent=47 // pred_check_branch
          %387 = sbr.rel (%p385) target = $region52
        $region51: #{tpu_custom_call.1} parent=47 // pred_region
          %s388 = sand.u32 %s162, 1
          %s389 = scalar_lea.sflag [#allocation3], %s388
          %s390 = sand.u32 %s162, 1
          %s391 = smul.addr %s390, 8
          %s392 = scalar_lea.vmem [#allocation2], %s391
          %393 = dma.done %s389, 128
        $region52: #{tpu_custom_call.1} parent=47 // pred_fallthru
          _
      $region48: #{tpu_custom_call.1} parent=5 // pred_fallthru
        _
    $region6: #{tpu_custom_call.1} parent=1 // loop_footer
      %s17 = sadd.s32 1, %s13
    $region7: #{tpu_custom_call.1} parent=1 // loop_footer_branch
      %12 = sbr.rel target = $region3
    $region8: #{tpu_custom_call.1} parent=1 // loop_exit
      _
    %394 = vsyncpa [#allocation3], 1
    %s395 = scalar_lea.sflag [#allocation3], 1
    %396 = vsyncpa %s395, 1

</llo_original>
